<compile_context>
chip_gen: v5e
topology: v5e:2x2
jax: 0.10.0
libtpu: 0.0.40
codegen_flags: <defaults>
</compile_context>

<pallas_src>
import math

import jax
import jax.numpy as jnp
from jax.experimental import pallas as pl
from jax.experimental.pallas import tpu as pltpu


# ----------------------------------------------------------------------------
# Pallas kernels
# ----------------------------------------------------------------------------
def _proj_kernel(x_ref, w_ref, b_ref, o_ref):
    """Input projection for layer 0 over ALL timesteps: (S*B, E) @ (E, 4H) + b."""
    o_ref[...] = (jnp.dot(x_ref[...], w_ref[...],
                          preferred_element_type=jnp.float32)
                  + b_ref[...])


def _make_fused_lstm_fc_kernel(num_layers, hidden_size):
    """Builds the fused multi-layer LSTM (+ final FC + sigmoid) kernel body."""
    H = hidden_size

    def kernel(*refs):
        it = iter(refs)
        xp0_ref = next(it)            # (1, B, 4H) layer-0 pre-projected gates
        whh_ref = next(it)            # (L, H, 4H) recurrent weights (fused gates)
        if num_layers > 1:
            wih_ref = next(it)        # (L-1, H, 4H) input weights, layers 1..L-1
            b_ref = next(it)          # (L-1, 1, 4H) combined bias, layers 1..L-1
        fcw_ref = next(it)            # (H, out)
        fcb_ref = next(it)            # (1, out)
        h0_ref = next(it)             # (L, B, H) initial hidden
        c0_ref = next(it)             # (L, B, H) initial cell
        sig_ref = next(it)            # (B, out) output: sigmoid(fc(h_last))
        hN_ref = next(it)             # (L, B, H) output + recurrent carry
        cN_ref = next(it)             # (L, B, H) output + recurrent carry

        t = pl.program_id(0)

        @pl.when(t == 0)
        def _():
            hN_ref[...] = h0_ref[...]
            cN_ref[...] = c0_ref[...]

        def lstm_cell(gates, c_prev):
            # gate order i, f, g, o packed along the 4H (=128) lane axis
            i_g = jax.nn.sigmoid(gates[:, 0 * H:1 * H])
            f_g = jax.nn.sigmoid(gates[:, 1 * H:2 * H])
            g_g = jnp.tanh(gates[:, 2 * H:3 * H])
            o_g = jax.nn.sigmoid(gates[:, 3 * H:4 * H])
            c_new = f_g * c_prev + i_g * g_g
            h_new = o_g * jnp.tanh(c_new)
            return h_new, c_new

        # ----- layer 0: input projection already hoisted (bias folded in) -----
        h_prev = hN_ref[0]                      # (B, H)
        c_prev = cN_ref[0]
        gates = xp0_ref[0] + jnp.dot(h_prev, whh_ref[0],
                                     preferred_element_type=jnp.float32)
        h_new, c_new = lstm_cell(gates, c_prev)
        hN_ref[0] = h_new
        cN_ref[0] = c_new
        layer_in = h_new

        # ----- layers 1..L-1 -----
        for l in range(1, num_layers):
            h_prev = hN_ref[l]
            c_prev = cN_ref[l]
            gates = (jnp.dot(layer_in, wih_ref[l - 1],
                             preferred_element_type=jnp.float32)
                     + jnp.dot(h_prev, whh_ref[l],
                               preferred_element_type=jnp.float32)
                     + b_ref[l - 1])
            h_new, c_new = lstm_cell(gates, c_prev)
            hN_ref[l] = h_new
            cN_ref[l] = c_new
            layer_in = h_new

        # ----- FC + sigmoid, only on the last timestep's top-layer hidden -----
        @pl.when(t == pl.num_programs(0) - 1)
        def _():
            logits = (jnp.dot(layer_in, fcw_ref[...],
                              preferred_element_type=jnp.float32)
                      + fcb_ref[...])
            sig_ref[...] = jax.nn.sigmoid(logits)

    return kernel


# ----------------------------------------------------------------------------
# Wrappers
# ----------------------------------------------------------------------------
def input_projection(x_flat, w, b):
    """(N, E) @ (E, 4H) + (1, 4H). One tiny single-block Pallas matmul."""
    N, E = x_flat.shape
    FourH = w.shape[-1]
    return pl.pallas_call(
        _proj_kernel,
        out_shape=jax.ShapeDtypeStruct((N, FourH), jnp.float32),
        in_specs=[
            pl.BlockSpec((N, E), lambda: (0, 0)),
            pl.BlockSpec((E, FourH), lambda: (0, 0)),
            pl.BlockSpec((1, FourH), lambda: (0, 0)),
        ],
        out_specs=pl.BlockSpec((N, FourH), lambda: (0, 0)),
        grid=(),
    )(x_flat, w, b)


def fused_lstm_fc(x_proj0, whh_all, wih_rest, b_rest, fc_w, fc_b, h0, c0):
    """Fused multi-layer LSTM over time + FC/sigmoid on the last timestep.

    x_proj0 : (S, B, 4H)   layer-0 input projection (bias folded in)
    whh_all : (L, H, 4H)   recurrent weights, fused gate order (i, f, g, o)
    wih_rest: (L-1, H, 4H) or None (if L == 1)
    b_rest  : (L-1, 1, 4H) or None
    Returns (sig (B, out), h_n (L, B, H), c_n (L, B, H)).
    """
    S, B, FourH = x_proj0.shape
    L, H, _ = whh_all.shape
    out = fc_w.shape[-1]

    const3 = lambda t: (0, 0, 0)
    const2 = lambda t: (0, 0)

    in_specs = [
        pl.BlockSpec((1, B, FourH), lambda t: (t, 0, 0)),   # x_proj0[t]
        pl.BlockSpec((L, H, FourH), const3),                # whh_all (resident)
    ]
    args = [x_proj0, whh_all]
    if L > 1:
        in_specs += [
            pl.BlockSpec((L - 1, H, FourH), const3),        # wih_rest (resident)
            pl.BlockSpec((L - 1, 1, FourH), const3),        # b_rest  (resident)
        ]
        args += [wih_rest, b_rest]
    in_specs += [
        pl.BlockSpec((H, out), const2),                     # fc_w
        pl.BlockSpec((1, out), const2),                     # fc_b
        pl.BlockSpec((L, B, H), const3),                    # h0
        pl.BlockSpec((L, B, H), const3),                    # c0
    ]
    args += [fc_w, fc_b, h0, c0]

    out_shapes = (
        jax.ShapeDtypeStruct((B, out), jnp.float32),        # sigmoid(fc(h_last))
        jax.ShapeDtypeStruct((L, B, H), jnp.float32),       # h_n
        jax.ShapeDtypeStruct((L, B, H), jnp.float32),       # c_n
    )
    out_specs = [
        pl.BlockSpec((B, out), const2),
        pl.BlockSpec((L, B, H), const3),                    # VMEM-resident carry
        pl.BlockSpec((L, B, H), const3),                    # VMEM-resident carry
    ]

    return pl.pallas_call(
        _make_fused_lstm_fc_kernel(L, H),
        out_shape=out_shapes,
        grid_spec=pltpu.PrefetchScalarGridSpec(
            num_scalar_prefetch=0,
            grid=(S,),
            in_specs=in_specs,
            out_specs=out_specs,
        ),
        compiler_params=pltpu.CompilerParams(
            dimension_semantics=("arbitrary",)),   # time axis is sequential
    )(*args)


def model_forward(params, tokens, prev_state, num_layers):
    """Mirrors Model.forward: returns (sig_out[:, -1], (h_n, c_n))."""
    h0_all, c0_all = prev_state                         # (L, B, H) each
    B, S = tokens.shape
    E = params["embedding"].shape[-1]
    H = h0_all.shape[-1]

    # Embedding gather (plain JAX glue).
    embed = jnp.take(params["embedding"], tokens, axis=0)    # (B, S, E)
    x_tm = jnp.transpose(embed, (1, 0, 2))                   # time-major (S, B, E)

    # Hoisted layer-0 input projection: all timesteps at once, outside the
    # sequential recurrence.
    x_flat = x_tm.reshape(S * B, E)
    x_proj = input_projection(x_flat, params["wih0"], params["b0"])
    x_proj = x_proj.reshape(S, B, 4 * H)                     # (S, B, 4H)

    sig, h_n, c_n = fused_lstm_fc(
        x_proj, params["whh_all"],
        params.get("wih_rest"), params.get("b_rest"),
        params["fc_w"], params["fc_b"], h0_all, c0_all)

    # FC was computed only on the last timestep; taking the last column of the
    # (B, out) result matches sig.view(B, -1)[:, -1] of the original module.
    sig_out = sig.reshape(B, -1)[:, -1]
    return sig_out, (h_n, c_n)


# ----------------------------------------------------------------------------
# Deterministic parameter init (PyTorch-style gate order i, f, g, o, fused)
# ----------------------------------------------------------------------------
def init_params(key, n_vocab, embedding_dim, hidden_size, num_layers,
                output_size):
    H = hidden_size
    params = {}
    key, k = jax.random.split(key)
    params["embedding"] = (jax.random.normal(k, (n_vocab, embedding_dim),
                                             dtype=jnp.float32) * 0.1)
    bound = 1.0 / math.sqrt(H)

    def u(k, shape):
        return jax.random.uniform(k, shape, minval=-bound, maxval=bound,
                                  dtype=jnp.float32)

    # Layer 0 (input dim = embedding_dim), gates fused along last axis.
    key, k1, k2, k3, k4 = jax.random.split(key, 5)
    params["wih0"] = u(k1, (embedding_dim, 4 * H))
    params["b0"] = u(k3, (1, 4 * H)) + u(k4, (1, 4 * H))     # b_ih + b_hh
    whh_list = [u(k2, (H, 4 * H))]

    wih_rest, b_rest = [], []
    for _ in range(1, num_layers):
        key, k1, k2, k3, k4 = jax.random.split(key, 5)
        wih_rest.append(u(k1, (H, 4 * H)))
        whh_list.append(u(k2, (H, 4 * H)))
        b_rest.append(u(k3, (1, 4 * H)) + u(k4, (1, 4 * H)))

    params["whh_all"] = jnp.stack(whh_list, axis=0)          # (L, H, 4H)
    if num_layers > 1:
        params["wih_rest"] = jnp.stack(wih_rest, axis=0)     # (L-1, H, 4H)
        params["b_rest"] = jnp.stack(b_rest, axis=0)         # (L-1, 1, 4H)

    key, k1, k2 = jax.random.split(key, 3)
    params["fc_w"] = u(k1, (H, output_size))
    params["fc_b"] = u(k2, (1, output_size))
    return params


# ----------------------------------------------------------------------------
if __name__ == "__main__":
    # Small, module-consistent shapes.
    n_vocab = 50
    embedding_dim = 16
    hidden_size = 32          # 4H = 128 -> exactly one full lane width
    num_layers = 2
    output_size = 1
    batch, seq = 2, 8

    key = jax.random.PRNGKey(0)
    key, pkey, tkey = jax.random.split(key, 3)

    params = init_params(pkey, n_vocab, embedding_dim, hidden_size,
                         num_layers, output_size)
    tokens = jax.random.randint(tkey, (batch, seq), 0, n_vocab,
                                dtype=jnp.int32)
    # init_hidden(batch)
    h0 = jnp.zeros((num_layers, batch, hidden_size), jnp.float32)
    c0 = jnp.zeros((num_layers, batch, hidden_size), jnp.float32)

    sig_out, (h_n, c_n) = model_forward(params, tokens, (h0, c0), num_layers)
    jax.block_until_ready((sig_out, h_n, c_n))

    assert sig_out.shape == (batch,)
    assert h_n.shape == (num_layers, batch, hidden_size)
    assert c_n.shape == (num_layers, batch, hidden_size)
    print("KERNEL_OK")
</pallas_src>

<mosaic_0001>
module attributes {stable_mosaic.version = 11 : i64} {
  func.func @_proj_kernel(%arg0: memref<16x16xf32, #tpu.memory_space<vmem>>, %arg1: memref<16x128xf32, #tpu.memory_space<vmem>>, %arg2: memref<1x128xf32, #tpu.memory_space<vmem>>, %arg3: memref<16x128xf32, #tpu.memory_space<vmem>>) attributes {dimension_semantics = [], scalar_prefetch = 0 : i64, scratch_operands = 0 : i64, tpu.core_type = #tpu.core_type<tc>} {
    %c0 = arith.constant 0 : index
    %c0_0 = arith.constant 0 : index
    %0 = vector.load %arg0[%c0, %c0_0] : memref<16x16xf32, #tpu.memory_space<vmem>>, vector<16x16xf32>
    %c0_1 = arith.constant 0 : index
    %c0_2 = arith.constant 0 : index
    %1 = vector.load %arg1[%c0_1, %c0_2] : memref<16x128xf32, #tpu.memory_space<vmem>>, vector<16x128xf32>
    %cst = arith.constant dense<0.000000e+00> : vector<16x128xf32>
    %2 = tpu.matmul %0, %1, %cst {dimension_numbers = #tpu.dot_dimension_numbers<[1], [0], [0], [1], [0, 0, 1, 1], [], []>} : vector<16x16xf32>, vector<16x128xf32>, vector<16x128xf32> -> vector<16x128xf32>
    %c0_3 = arith.constant 0 : index
    %c0_4 = arith.constant 0 : index
    %3 = vector.load %arg2[%c0_3, %c0_4] : memref<1x128xf32, #tpu.memory_space<vmem>>, vector<1x128xf32>
    %4 = vector.broadcast %3 : vector<1x128xf32> to vector<16x128xf32>
    %5 = arith.addf %2, %4 : vector<16x128xf32>
    %c0_5 = arith.constant 0 : index
    %c0_6 = arith.constant 0 : index
    %6 = vector.load %arg3[%c0_5, %c0_6] : memref<16x128xf32, #tpu.memory_space<vmem>>, vector<16x128xf32>
    tpu.vector_store %arg3[%c0_5, %c0_6], %5 {strides = array<i32>} : memref<16x128xf32, #tpu.memory_space<vmem>>, vector<16x128xf32>,
    return
  }
}

</mosaic_0001>

<llo_original>
// kernel: tpu_custom_call.1
$region0: #{tpu_custom_call.1}
  #allocation0 [shape = 'u32[]', space=smem, size = 0x4, offset = 0x4, fixed_abs, tag = 'smem constant byte address 0x4 - core index']
  #allocation1 [shape = 'u32[72,128]{1,0:T(1,128)}', space=vmem, size = 0x9000, scoped, tag = 'internal scratch']
  %s0 = inlined_call_operand.hbm [shape: f32[16,16], index: 0, kind: input, shape index: {}]
  %s1 = inlined_call_operand.hbm [shape: f32[16,128], index: 1, kind: input, shape index: {}]
  %s2 = inlined_call_operand.vmem [shape: f32[1,128], index: 2, kind: input, shape index: {}]
  %s3 = inlined_call_operand.hbm [shape: f32[16,128], index: 3, kind: output, shape index: {}]
  %s4 = sld [smem:[#allocation0]]
  $region30: #{tpu_custom_call.1} parent=0
    _
  %s6 = ssub.s32 1, %s4
  %s7 = scalar_select 0, %s6, %s4
  $region1: #{tpu_custom_call.1} parent=0
    #allocation2 [shape = 'u8[8192]{0}', space=vmem, size = 0x2000, scoped, tag = 'input window, operand 0, single buffered']
    #allocation3 [shape = 's32[1]{0}', space=sflag, size = 0x4, scoped, tag = 'scoped memory for tpu_custom_call.1']
    #allocation4 [shape = 's32[1]{0}', space=sflag, size = 0x4, scoped, tag = 'scoped memory for tpu_custom_call.1']
    #allocation5 [shape = 'u8[8192]{0}', space=vmem, size = 0x2000, scoped, tag = 'input window, operand 1, single buffered']
    #allocation6 [shape = 's32[1]{0}', space=sflag, size = 0x4, scoped, tag = 'scoped memory for tpu_custom_call.1']
    #allocation7 [shape = 'u8[8192]{0}', space=vmem, size = 0x2000, scoped, tag = 'output window, operand 0, single buffered']
    %8 = vsyncpa [#allocation3], 0
    %9 = vsyncpa [#allocation6], 0
    %10 = vsyncpa [#allocation4], 0
    // Predicated region
    $region2: #{tpu_custom_call.1} parent=1 // pred_check
      _
    $region3: #{tpu_custom_call.1} parent=1 // pred_check_branch
      %12 = sbr.rel (0) target = $region5
    $region4: #{tpu_custom_call.1} parent=1 // pred_region
      %14 = vsyncadd [#allocation3], 0
      %s15 = sshll.u32 %s0, 4
      %s16 = int_to_ptr.hbm [resolvable:$true] %s15
      %s17 = sshll.u32 [#allocation2], 4
      %s18 = int_to_ptr.vmem [resolvable:$true] %s17
      %23 = dma.hbm_to_vmem [thread:$0]  %s16, 256, %s18, [#allocation3], 128, 128, 8
    $region5: #{tpu_custom_call.1} parent=1 // pred_fallthru
      _
    // Predicated region
    $region6: #{tpu_custom_call.1} parent=1 // pred_check
      _
    $region7: #{tpu_custom_call.1} parent=1 // pred_check_branch
      %25 = sbr.rel (0) target = $region9
    $region8: #{tpu_custom_call.1} parent=1 // pred_region
      %27 = vsyncadd [#allocation6], 0
      %s28 = sshll.u32 %s1, 4
      %s29 = int_to_ptr.hbm [resolvable:$true] %s28
      %s30 = sshll.u32 [#allocation5], 4
      %s31 = int_to_ptr.vmem [resolvable:$true] %s30
      %36 = dma.hbm_to_vmem [thread:$0]  %s29, 256, %s31, [#allocation6], 128, 128, 8
    $region9: #{tpu_custom_call.1} parent=1 // pred_fallthru
      _
    // Predicated region
    $region10: #{tpu_custom_call.1} parent=1 // pred_check
      _
    $region11: #{tpu_custom_call.1} parent=1 // pred_check_branch
      %38 = sbr.rel (0) target = $region13
    $region12: #{tpu_custom_call.1} parent=1 // pred_region
      _
    $region13: #{tpu_custom_call.1} parent=1 // pred_fallthru
      _
    // Predicated region
    $region14: #{tpu_custom_call.1} parent=1 // pred_check
      _
    $region15: #{tpu_custom_call.1} parent=1 // pred_check_branch
      %40 = sbr.rel (0) target = $region17
    $region16: #{tpu_custom_call.1} parent=1 // pred_region
      %42 = dma.done [#allocation3], 256
    $region17: #{tpu_custom_call.1} parent=1 // pred_fallthru
      _
    // Predicated region
    $region18: #{tpu_custom_call.1} parent=1 // pred_check
      _
    $region19: #{tpu_custom_call.1} parent=1 // pred_check_branch
      %44 = sbr.rel (0) target = $region21
    $region20: #{tpu_custom_call.1} parent=1 // pred_region
      %46 = dma.done [#allocation6], 256
    $region21: #{tpu_custom_call.1} parent=1 // pred_fallthru
      _
    %v47 = vld [vmem:[#allocation2] sm:$0xff]
    %v48 = vld [vmem:[#allocation2 + $0x8] sm:$0xff]
    %v49 = vld [vmem:[#allocation5] sm:$0xff]
    %v50 = vld [vmem:[#allocation5 + $0x8] sm:$0xff]
    %v51 = vld [vmem:[%s2] sm:$0x1]
    %v53 = vperm.slane %v51, 0
    %vm55 = vcmask 130048
    %v57 = vsel %vm55, %v47, 0
    %v60 = vsel %vm55, %v48, 0
    %62 = vmatpush.msra.mxu0 0.0
    %63 = vmatpush.msra.mxu0 0.0
    %64 = vmatpush.msra.mxu0 0.0
    %65 = vmatpush.msra.mxu0 0.0
    %66 = vmatpush.msra.mxu0 0.0
    %67 = vmatpush.msra.mxu0 0.0
    %68 = vmatpush.msra.mxu0 0.0
    %69 = vmatpush.msra.mxu0 0.0
    %70 = vmatpush.msra.mxu0 0.0
    %71 = vmatpush.msra.mxu0 0.0
    %72 = vmatpush.msra.mxu0 0.0
    %73 = vmatpush.msra.mxu0 0.0
    %74 = vmatpush.msra.mxu0 0.0
    %75 = vmatpush.msra.mxu0 0.0
    %76 = vmatpush.msra.mxu0 %v50
    %77 = vmatpush.msra.mxu0 %v49
    %78 = vmatmul.f32.gmra.mxu0 %v57
    %v79 = vpop.f32.mrf.mxu0
    %v80 = vadd.f32 %v53, %v79
    %81 = vmatmul.f32.gmra.mxu0 %v60
    %v82 = vpop.f32.mrf.mxu0
    %v83 = vadd.f32 %v53, %v82
    %84 = vdwg.mxu0
    %85 = vst [vmem:[#allocation7] sm:$0xff] %v80
    %86 = vst [vmem:[#allocation7 + $0x8] sm:$0xff] %v83
    // Predicated region
    $region22: #{tpu_custom_call.1} parent=1 // pred_check
      _
    $region23: #{tpu_custom_call.1} parent=1 // pred_check_branch
      %88 = sbr.rel (0) target = $region25
    $region24: #{tpu_custom_call.1} parent=1 // pred_region
      %90 = vsyncadd [#allocation4], 0
      %s91 = sshll.u32 [#allocation7], 4
      %s92 = int_to_ptr.vmem [resolvable:$true] %s91
      %s93 = sshll.u32 %s3, 4
      %s94 = int_to_ptr.hbm [resolvable:$true] %s93
      %99 = dma.vmem_to_hbm [thread:$0]  %s92, 256, %s94, [#allocation4], 128, 128, 8
    $region25: #{tpu_custom_call.1} parent=1 // pred_fallthru
      _
    // Predicated region
    $region26: #{tpu_custom_call.1} parent=1 // pred_check
      _
    $region27: #{tpu_custom_call.1} parent=1 // pred_check_branch
      %101 = sbr.rel (0) target = $region29
    $region28: #{tpu_custom_call.1} parent=1 // pred_region
      %103 = dma.done [#allocation4], 256
    $region29: #{tpu_custom_call.1} parent=1 // pred_fallthru
      _
    %104 = vsyncpa [#allocation3], 1
    %105 = vsyncpa [#allocation6], 1
    %106 = vsyncpa [#allocation4], 1

</llo_original>
